<compile_context>
chip_gen: v5e
topology: v5e:2x2
jax: 0.10.0
libtpu: 0.0.40
codegen_flags: <defaults>
</compile_context>

<pallas_src>
import jax
import jax.numpy as jnp
from jax.experimental import pallas as pl
from jax.experimental.pallas import tpu as pltpu


def _round_up(x, m):
    return ((x + m - 1) // m) * m


def _vmem_capacity_bytes():
    try:
        cap = int(pltpu.get_tpu_info().vmem_capacity_bytes)
        if cap > 0:
            return cap
    except Exception:
        pass
    return 64 * 1024 * 1024  # conservative fallback (v7x per-TC)


def _make_stream_kernel(num_layers, num_graphs, tile_n, tiles_per_chunk,
                        num_nodes, ragged):
    """Streaming kernel: JK-max over layer tiles + per-graph sum pooling.

    grid = (num_chunks, tiles_per_chunk); output [num_chunks, G, D] holds one f32
    partial sum per node chunk (output-resident accumulator along the inner axis).
    """

    def kernel(*refs):
        layer_refs = refs[:num_layers]
        bidx_ref = refs[num_layers]
        part_ref = refs[num_layers + 1]

        c = pl.program_id(0)
        i = pl.program_id(1)

        @pl.when(i == 0)
        def _init():
            part_ref[...] = jnp.zeros_like(part_ref)

        # --- JumpingKnowledge('max'): running elementwise max in streaming dtype ---
        h_jk = layer_refs[0][...]                                   # [TILE_N, D]
        for r in layer_refs[1:]:
            h_jk = jnp.maximum(h_jk, r[...])

        # --- one-hot pooling mask, graphs on sublanes / nodes on lanes: [G, TILE_N] ---
        bidx = bidx_ref[...]                                        # [1, TILE_N] int32
        g_iota = jax.lax.broadcasted_iota(jnp.int32, (num_graphs, tile_n), 0)
        match = g_iota == bidx                                      # [G, TILE_N] bool

        if ragged:
            # Only compiled when the logical tile range over-covers N.
            tile_start = (c * tiles_per_chunk + i) * tile_n
            pos_row = (jax.lax.broadcasted_iota(jnp.int32, (1, tile_n), 1)
                       + tile_start)                                # [1, TILE_N]
            match = jnp.logical_and(match, pos_row < num_nodes)
            pos_col = (jax.lax.broadcasted_iota(jnp.int32, (tile_n, 1), 0)
                       + tile_start)                                # [TILE_N, 1]
            # Zero out-of-range rows so garbage/NaN cannot poison the matmul.
            h_jk = jnp.where(pos_col < num_nodes, h_jk, jnp.zeros_like(h_jk))

        onehot = match.astype(h_jk.dtype)                           # [G, TILE_N]

        # --- per-graph feature sums on the MXU: [G, TILE_N] @ [TILE_N, D] (f32 acc) ---
        part_ref[...] += jnp.dot(onehot, h_jk,
                                 preferred_element_type=jnp.float32)[None]

    return kernel


def _combine_kernel(part_ref, invc_ref, w1_ref, b1_ref, w2_ref, b2_ref, out_ref):
    """Sum chunk partials, apply mean scaling and the post-mp MLP."""
    pooled = jnp.sum(part_ref[...], axis=0) * invc_ref[...]         # [G, D]
    hidden = jnp.dot(pooled, w1_ref[...],
                     preferred_element_type=jnp.float32) + b1_ref[...]
    hidden = jnp.maximum(hidden, 0.0)
    out = jnp.dot(hidden, w2_ref[...],
                  preferred_element_type=jnp.float32) + b2_ref[...]
    out_ref[...] = out.astype(out_ref.dtype)


def gnn_graph_head_jk(h_list, x, batch_idx, num_graphs, params, *,
                      tile_n=None, num_chunks=None):
    """GNNGraphHeadJK forward (JK='max', mean pooling, 2-layer post-mp MLP)."""
    # h = h[1:] + [batch.x]   (JK 'max' branch of the PyTorch forward)
    layers = list(h_list[1:]) + [x]
    num_layers = len(layers)
    N, D = layers[0].shape
    feat_dtype = layers[0].dtype
    feat_bytes = jnp.dtype(feat_dtype).itemsize

    w1, b1, w2, b2 = params
    w1 = w1.astype(jnp.float32)
    w2 = w2.astype(jnp.float32)
    b1_2d = b1.astype(jnp.float32).reshape(1, -1)
    b2_2d = b2.astype(jnp.float32).reshape(1, -1)
    dim_out = w2.shape[1]

    # node -> graph index as a lane-major [1, N] int32 row (4 bytes/node from HBM).
    batch_idx = batch_idx.astype(jnp.int32)
    bidx_row = batch_idx.reshape(1, N)

    # per-graph reciprocal counts (applied post-accumulation in f32).
    counts = jnp.zeros((num_graphs,), jnp.float32).at[batch_idx].add(1.0)
    inv_counts = (1.0 / jnp.maximum(counts, 1.0)).reshape(num_graphs, 1)

    # ---- generation- and lane-padding-aware tiling ---------------------------
    vmem_cap = _vmem_capacity_bytes()
    if vmem_cap <= 64 * 1024 * 1024:               # v7x-class: 64 MiB per TC
        usable = min(vmem_cap - 8 * 1024 * 1024, 48 * 1024 * 1024)
        tile_max = 2048
    else:                                          # v5e / v6e: 128 MiB
        usable = min(vmem_cap - 16 * 1024 * 1024, 112 * 1024 * 1024)
        tile_max = 8192
    usable = max(usable, 16 * 1024 * 1024)

    D_pad = _round_up(D, 128)
    # bytes per node slot: double-buffered layer tiles + 8-sublane-padded index row.
    per_node_bytes = num_layers * 2 * D_pad * feat_bytes + 2 * 8 * 4

    if tile_n is None:
        tile_n = min((usable // 2) // per_node_bytes, tile_max)
    if tile_n >= N:
        tile_n = N                                  # single full tile: blocks == array dims
    else:
        tile_n = max(128, (tile_n // 128) * 128)    # lane-aligned node tiles

    num_tiles = pl.cdiv(N, tile_n)
    if num_chunks is None:
        num_chunks = 2 if num_tiles >= 2 else 1     # v7x: one node chunk per TensorCore
    num_chunks = max(1, min(num_chunks, num_tiles))
    tiles_per_chunk = pl.cdiv(num_tiles, num_chunks)
    ragged = (num_chunks * tiles_per_chunk * tile_n) != N
    last_block = num_tiles - 1

    def node_map(c, i):
        return (jnp.minimum(c * tiles_per_chunk + i, last_block), 0)

    def bidx_map(c, i):
        return (0, jnp.minimum(c * tiles_per_chunk + i, last_block))

    vmem_est = (num_layers * 2 * tile_n * D_pad * feat_bytes
                + 2 * 8 * _round_up(tile_n, 128) * 4
                + 2 * _round_up(num_graphs, 8) * D_pad * 4)
    vmem_limit = int(min(usable, max(2 * vmem_est, 16 * 1024 * 1024)))

    cost = pl.CostEstimate(
        flops=int(2 * N * num_graphs * D + num_layers * N * D),
        transcendentals=0,
        bytes_accessed=int(num_layers * N * D * feat_bytes + 4 * N
                           + 4 * num_chunks * num_graphs * D),
    )

    grid_spec = pltpu.PrefetchScalarGridSpec(
        num_scalar_prefetch=0,
        grid=(num_chunks, tiles_per_chunk),
        in_specs=([pl.BlockSpec((tile_n, D), node_map) for _ in range(num_layers)]
                  + [pl.BlockSpec((1, tile_n), bidx_map)]),
        out_specs=pl.BlockSpec((1, num_graphs, D), lambda c, i: (c, 0, 0)),
    )

    partials = pl.pallas_call(
        _make_stream_kernel(num_layers, num_graphs, tile_n, tiles_per_chunk,
                            N, ragged),
        out_shape=jax.ShapeDtypeStruct((num_chunks, num_graphs, D), jnp.float32),
        grid_spec=grid_spec,
        compiler_params=pltpu.CompilerParams(
            dimension_semantics=("parallel", "arbitrary"),
            vmem_limit_bytes=vmem_limit),
        cost_estimate=cost,
    )(*layers, bidx_row)

    # Tiny combine kernel: sum chunk partials, mean-scale, run the post-mp MLP.
    pred = pl.pallas_call(
        _combine_kernel,
        out_shape=jax.ShapeDtypeStruct((num_graphs, dim_out), jnp.float32),
    )(partials, inv_counts, w1, b1_2d, w2, b2_2d)
    return pred


if __name__ == "__main__":
    key = jax.random.PRNGKey(0)

    # Small, module-consistent shapes.  N is chosen so the node range is ragged
    # against 2 chunks x 2 tiles x 128 nodes (exercises the clamp + mask path).
    layers_mp = 4      # number of message-passing layer outputs in h
    N = 300            # total nodes across the batch
    D = 32             # dim_in (node feature / hidden dim)
    dim_out = 10       # peptides-func style multi-label output
    G = 2              # graphs in the batch
    TILE_N = 128

    ks = jax.random.split(key, 8)
    h_list = [jax.random.normal(ks[i], (N, D), dtype=jnp.float32)
              for i in range(layers_mp)]
    x = jax.random.normal(ks[4], (N, D), dtype=jnp.float32)            # batch.x
    batch_idx = jnp.concatenate([jnp.zeros(N // 2, jnp.int32),
                                 jnp.ones(N - N // 2, jnp.int32)])     # batch.batch
    y = jax.random.bernoulli(ks[5], 0.5, (G, dim_out)).astype(jnp.float32)  # batch.y

    # post-mp MLP parameters: Linear(D, D) -> ReLU -> Linear(D, dim_out)
    w1 = jax.random.normal(ks[6], (D, D), dtype=jnp.float32) / jnp.sqrt(D)
    b1 = jnp.zeros((D,), jnp.float32)
    w2 = jax.random.normal(ks[7], (D, dim_out), dtype=jnp.float32) / jnp.sqrt(D)
    b2 = jnp.zeros((dim_out,), jnp.float32)
    params = (w1, b1, w2, b2)

    def reference(layer_list, xx):
        feats = [a.astype(jnp.float32) for a in (list(layer_list[1:]) + [xx])]
        h_jk = jnp.max(jnp.stack(feats, axis=0), axis=0)
        one_hot = (batch_idx[None, :] == jnp.arange(G)[:, None]).astype(jnp.float32)
        ge = (one_hot / one_hot.sum(1, keepdims=True)) @ h_jk
        return jnp.maximum(ge @ w1 + b1, 0.0) @ w2 + b2

    # --- f32 run (tight check) ---
    pred = gnn_graph_head_jk(h_list, x, batch_idx, G, params, tile_n=TILE_N)
    label = y                                                          # _apply_index
    jax.block_until_ready(pred)
    ref = reference(h_list, x)
    assert pred.shape == (G, dim_out) and label.shape == (G, dim_out)
    assert jnp.allclose(pred, ref, atol=1e-4, rtol=1e-4), "f32 mismatch vs reference"

    # --- bf16 streaming smoke test (half the HBM traffic; f32 accumulation) ---
    h_bf16 = [h.astype(jnp.bfloat16) for h in h_list]
    x_bf16 = x.astype(jnp.bfloat16)
    pred_bf16 = gnn_graph_head_jk(h_bf16, x_bf16, batch_idx, G, params, tile_n=TILE_N)
    jax.block_until_ready(pred_bf16)
    ref_bf16 = reference(h_bf16, x_bf16)
    assert jnp.allclose(pred_bf16, ref_bf16, atol=5e-2, rtol=5e-2), \
        "bf16 mismatch vs reference"

    print("KERNEL_OK")
</pallas_src>

<mosaic_0001>
module attributes {stable_mosaic.version = 11 : i64} {
  func.func @kernel(%arg0: i32, %arg1: i32, %arg2: memref<128x32xf32, #tpu.memory_space<vmem>>, %arg3: memref<128x32xf32, #tpu.memory_space<vmem>>, %arg4: memref<128x32xf32, #tpu.memory_space<vmem>>, %arg5: memref<128x32xf32, #tpu.memory_space<vmem>>, %arg6: memref<1x128xi32, #tpu.memory_space<vmem>>, %arg7: memref<1x2x32xf32, #tpu.memory_space<vmem>>) attributes {dimension_semantics = [#tpu.dimension_semantics<parallel>, #tpu.dimension_semantics<arbitrary>], iteration_bounds = array<i64: 2, 2>, scalar_prefetch = 0 : i64, scratch_operands = 0 : i64, tpu.core_type = #tpu.core_type<tc>, window_params = [{transform_indices = @transform_0, window_bounds = array<i64: 128, 32>}, {transform_indices = @transform_1, window_bounds = array<i64: 128, 32>}, {transform_indices = @transform_2, window_bounds = array<i64: 128, 32>}, {transform_indices = @transform_3, window_bounds = array<i64: 128, 32>}, {transform_indices = @transform_4, window_bounds = array<i64: 1, 128>}, {transform_indices = @transform_5, window_bounds = array<i64: 1, 2, 32>}]} {
    %c0_i32 = arith.constant 0 : i32
    %0 = arith.cmpi eq, %arg1, %c0_i32 : i32
    %1 = arith.extui %0 : i1 to i32
    %c0_i32_0 = arith.constant 0 : i32
    %2 = arith.cmpi ne, %1, %c0_i32_0 : i32
    scf.if %2 {
      %cst_18 = arith.constant 0.000000e+00 : f32
      %40 = vector.broadcast %cst_18 : f32 to vector<1x2x32xf32>
      %c0_19 = arith.constant 0 : index
      %c0_20 = arith.constant 0 : index
      %c0_21 = arith.constant 0 : index
      %41 = vector.load %arg7[%c0_19, %c0_20, %c0_21] : memref<1x2x32xf32, #tpu.memory_space<vmem>>, vector<1x2x32xf32>
      tpu.vector_store %arg7[%c0_19, %c0_20, %c0_21], %40 {strides = array<i32>} : memref<1x2x32xf32, #tpu.memory_space<vmem>>, vector<1x2x32xf32>,
    } else {
    }
    %c0 = arith.constant 0 : index
    %c0_1 = arith.constant 0 : index
    %3 = vector.load %arg2[%c0, %c0_1] : memref<128x32xf32, #tpu.memory_space<vmem>>, vector<128x32xf32>
    %c0_2 = arith.constant 0 : index
    %c0_3 = arith.constant 0 : index
    %4 = vector.load %arg3[%c0_2, %c0_3] : memref<128x32xf32, #tpu.memory_space<vmem>>, vector<128x32xf32>
    %5 = arith.maximumf %3, %4 : vector<128x32xf32>
    %c0_4 = arith.constant 0 : index
    %c0_5 = arith.constant 0 : index
    %6 = vector.load %arg4[%c0_4, %c0_5] : memref<128x32xf32, #tpu.memory_space<vmem>>, vector<128x32xf32>
    %7 = arith.maximumf %5, %6 : vector<128x32xf32>
    %c0_6 = arith.constant 0 : index
    %c0_7 = arith.constant 0 : index
    %8 = vector.load %arg5[%c0_6, %c0_7] : memref<128x32xf32, #tpu.memory_space<vmem>>, vector<128x32xf32>
    %9 = arith.maximumf %7, %8 : vector<128x32xf32>
    %c0_8 = arith.constant 0 : index
    %c0_9 = arith.constant 0 : index
    %10 = vector.load %arg6[%c0_8, %c0_9] : memref<1x128xi32, #tpu.memory_space<vmem>>, vector<1x128xi32>
    %11 = tpu.iota {dimensions = array<i32: 0>} : vector<2x128xi32>
    %12 = vector.broadcast %10 : vector<1x128xi32> to vector<2x128xi32>
    %13 = arith.cmpi eq, %11, %12 : vector<2x128xi32>
    %c2_i32 = arith.constant 2 : i32
    %14 = arith.muli %arg0, %c2_i32 : i32
    %15 = arith.addi %14, %arg1 : i32
    %c128_i32 = arith.constant 128 : i32
    %16 = arith.muli %15, %c128_i32 : i32
    %17 = tpu.iota {dimensions = array<i32: 1>} : vector<1x128xi32>
    %18 = vector.broadcast %16 : i32 to vector<1x128xi32>
    %19 = arith.addi %17, %18 : vector<1x128xi32>
    %c300_i32 = arith.constant 300 : i32
    %20 = vector.broadcast %c300_i32 : i32 to vector<1x128xi32>
    %21 = arith.cmpi slt, %19, %20 : vector<1x128xi32>
    %22 = vector.broadcast %21 : vector<1x128xi1> to vector<2x128xi1>
    %23 = arith.andi %13, %22 : vector<2x128xi1>
    %24 = tpu.iota {dimensions = array<i32: 0>} : vector<128x1xi32>
    %25 = vector.broadcast %16 : i32 to vector<128x1xi32>
    %26 = arith.addi %24, %25 : vector<128x1xi32>
    %c300_i32_10 = arith.constant 300 : i32
    %27 = vector.broadcast %c300_i32_10 : i32 to vector<128x1xi32>
    %28 = arith.cmpi slt, %26, %27 : vector<128x1xi32>
    %cst = arith.constant 0.000000e+00 : f32
    %29 = vector.broadcast %cst : f32 to vector<128x32xf32>
    %30 = vector.shape_cast %28 : vector<128x1xi1> to vector<128x1xi1>
    %31 = vector.broadcast %30 : vector<128x1xi1> to vector<128x32xi1>
    %32 = arith.select %31, %9, %29 : vector<128x32xi1>, vector<128x32xf32>
    %33 = arith.extui %23 : vector<2x128xi1> to vector<2x128xi32>
    %34 = arith.sitofp %33 : vector<2x128xi32> to vector<2x128xf32>
    %c0_11 = arith.constant 0 : index
    %c0_12 = arith.constant 0 : index
    %c0_13 = arith.constant 0 : index
    %35 = vector.load %arg7[%c0_11, %c0_12, %c0_13] : memref<1x2x32xf32, #tpu.memory_space<vmem>>, vector<1x2x32xf32>
    %cst_14 = arith.constant dense<0.000000e+00> : vector<2x32xf32>
    %36 = tpu.matmul %34, %32, %cst_14 {dimension_numbers = #tpu.dot_dimension_numbers<[1], [0], [0], [1], [0, 0, 1, 1], [], []>} : vector<2x128xf32>, vector<128x32xf32>, vector<2x32xf32> -> vector<2x32xf32>
    %37 = vector.shape_cast %36 : vector<2x32xf32> to vector<1x2x32xf32>
    %38 = arith.addf %35, %37 : vector<1x2x32xf32>
    %c0_15 = arith.constant 0 : index
    %c0_16 = arith.constant 0 : index
    %c0_17 = arith.constant 0 : index
    %39 = vector.load %arg7[%c0_15, %c0_16, %c0_17] : memref<1x2x32xf32, #tpu.memory_space<vmem>>, vector<1x2x32xf32>
    tpu.vector_store %arg7[%c0_15, %c0_16, %c0_17], %38 {strides = array<i32>} : memref<1x2x32xf32, #tpu.memory_space<vmem>>, vector<1x2x32xf32>,
    return
  }
  func.func @transform_0(%arg0: i32, %arg1: i32) -> (i32, i32) {
    %c2_i32 = arith.constant 2 : i32
    %0 = arith.muli %arg0, %c2_i32 : i32
    %1 = arith.addi %0, %arg1 : i32
    %c2_i32_0 = arith.constant 2 : i32
    %2 = arith.minsi %1, %c2_i32_0 : i32
    %c0_i32 = arith.constant 0 : i32
    %c0_i32_1 = arith.constant 0 : i32
    return %2, %c0_i32 : i32, i32
  }
  func.func @transform_1(%arg0: i32, %arg1: i32) -> (i32, i32) {
    %c2_i32 = arith.constant 2 : i32
    %0 = arith.muli %arg0, %c2_i32 : i32
    %1 = arith.addi %0, %arg1 : i32
    %c2_i32_0 = arith.constant 2 : i32
    %2 = arith.minsi %1, %c2_i32_0 : i32
    %c0_i32 = arith.constant 0 : i32
    %c0_i32_1 = arith.constant 0 : i32
    return %2, %c0_i32 : i32, i32
  }
  func.func @transform_2(%arg0: i32, %arg1: i32) -> (i32, i32) {
    %c2_i32 = arith.constant 2 : i32
    %0 = arith.muli %arg0, %c2_i32 : i32
    %1 = arith.addi %0, %arg1 : i32
    %c2_i32_0 = arith.constant 2 : i32
    %2 = arith.minsi %1, %c2_i32_0 : i32
    %c0_i32 = arith.constant 0 : i32
    %c0_i32_1 = arith.constant 0 : i32
    return %2, %c0_i32 : i32, i32
  }
  func.func @transform_3(%arg0: i32, %arg1: i32) -> (i32, i32) {
    %c2_i32 = arith.constant 2 : i32
    %0 = arith.muli %arg0, %c2_i32 : i32
    %1 = arith.addi %0, %arg1 : i32
    %c2_i32_0 = arith.constant 2 : i32
    %2 = arith.minsi %1, %c2_i32_0 : i32
    %c0_i32 = arith.constant 0 : i32
    %c0_i32_1 = arith.constant 0 : i32
    return %2, %c0_i32 : i32, i32
  }
  func.func @transform_4(%arg0: i32, %arg1: i32) -> (i32, i32) {
    %c2_i32 = arith.constant 2 : i32
    %0 = arith.muli %arg0, %c2_i32 : i32
    %1 = arith.addi %0, %arg1 : i32
    %c2_i32_0 = arith.constant 2 : i32
    %2 = arith.minsi %1, %c2_i32_0 : i32
    %c0_i32 = arith.constant 0 : i32
    %c0_i32_1 = arith.constant 0 : i32
    return %c0_i32, %2 : i32, i32
  }
  func.func @transform_5(%arg0: i32, %arg1: i32) -> (i32, i32, i32) {
    %c0_i32 = arith.constant 0 : i32
    %c0_i32_0 = arith.constant 0 : i32
    %c0_i32_1 = arith.constant 0 : i32
    return %arg0, %c0_i32, %c0_i32_0 : i32, i32, i32
  }
}

</mosaic_0001>

<llo_original>
// kernel: tpu_custom_call.1
$region0: #{tpu_custom_call.1}
  #allocation0 [shape = 'u32[]', space=smem, size = 0x4, offset = 0x4, fixed_abs, tag = 'smem constant byte address 0x4 - core index']
  #allocation1 [shape = 'u32[72,128]{1,0:T(1,128)}', space=vmem, size = 0x9000, scoped, tag = 'internal scratch']
  %s0 = inlined_call_operand.vmem [shape: f32[300,32], index: 0, kind: input, shape index: {}]
  %s1 = inlined_call_operand.vmem [shape: f32[300,32], index: 1, kind: input, shape index: {}]
  %s2 = inlined_call_operand.vmem [shape: f32[300,32], index: 2, kind: input, shape index: {}]
  %s3 = inlined_call_operand.vmem [shape: f32[300,32], index: 3, kind: input, shape index: {}]
  %s4 = inlined_call_operand.vmem [shape: s32[1,300], index: 4, kind: input, shape index: {}]
  %s5 = inlined_call_operand.hbm [shape: f32[2,2,32], index: 5, kind: output, shape index: {}]
  %s6 = sld [smem:[#allocation0]]
  $region57: #{tpu_custom_call.1} parent=0
    _
  %s8 = ssub.s32 1, %s6
  %s9 = scalar_select 0, %s8, %s6
  $region1: #{tpu_custom_call.1} parent=0
    #allocation2 [shape = 'u8[2048]{0}', space=vmem, size = 0x800, scoped, tag = 'output window, operand 0']
    #allocation3 [shape = 's32[2]{0}', space=sflag, size = 0x8, scoped, tag = 'scoped memory for tpu_custom_call.1']
    %10 = vsyncpa [#allocation3], 0
    %s11 = scalar_lea.sflag [#allocation3], 1
    %12 = vsyncpa %s11, 0
    loop: start=0, step=1, limit=6
    $region2: #{tpu_custom_call.1} parent=1 // loop_pre_header
      _
    $region3: #{tpu_custom_call.1} parent=1 // loop_header
      %s14 = sphi 0, %s18
      %p15 = scmp.ge.s32.totalorder %s14, 6
      %s21 = sphi 0, %s33
      %s22 = sphi 0, %s29
      %s23 = sphi 0, %s21
      %s24 = sphi 0, %s22
      %s25 = sphi 0, %s23
      %s26 = sphi 0, %s24
      %s44 = sphi 0, %s46
      %s47 = sphi 0, %s44
      %s48 = sphi 0, %s47
      %s64 = sphi 0, %s48
      %s78 = sphi 0, %s80
      %s81 = sphi 0, %s78
      %s82 = sphi 0, %s81
      %s98 = sphi 0, %s82
      %s112 = sphi 0, %s114
      %s115 = sphi 0, %s112
      %s116 = sphi 0, %s115
      %s132 = sphi 0, %s116
      %s146 = sphi 0, %s148
      %s149 = sphi 0, %s146
      %s150 = sphi 0, %s149
      %s166 = sphi 0, %s150
      %s180 = sphi 0, %s182
      %s183 = sphi 0, %s180
      %s184 = sphi 0, %s183
      %s200 = sphi 0, %s184
      %s206 = sphi 0, %s208
      %s209 = sphi 0, %s206
      %s210 = sphi 0, %s209
      %s226 = sphi 0, %s210
    $region4: #{tpu_custom_call.1} parent=1 // loop_header_branch
      %17 = sbr.rel (%p15) target = $region8
    $region5: #{tpu_custom_call.1} parent=1 // loop_body
      %s19 = ssub.s32 %s14, 1
      %s20 = ssub.s32 %s14, 2
      %s27 = sadd.s32 1, %s22
      %p28 = scmp.ge.s32.totalorder %s27, 2
      %s29 = scalar_select %p28, 0, %s27
      %s30 = sadd.s32 1, %s21
      %s31 = scalar_select %p28, %s30, %s21
      %p32 = scmp.ge.s32.totalorder %s31, 2
      %s33 = scalar_select %p32, 0, %s31
      %s34 = smul.u32 %s21, 2
      %s35 = sadd.s32 %s34, %s22
      %p36 = scmp.lt.s32.totalorder %s35, 2
      %s37 = scalar_select %p36, %s35, 2
      %s38 = smul.u32 %s33, 2
      %s39 = sadd.s32 %s38, %s29
      %p40 = scmp.lt.s32.totalorder %s39, 2
      %s41 = scalar_select %p40, %s39, 2
      %s42 = ssub.s32 %s37, %s41
      %p43 = scmp.eq.s32.totalorder %s42, 0
      %s45 = sadd.s32 %s44, 1
      %s46 = scalar_select %p43, %s44, %s45
      %p49 = pneg %p43
      %p50 = scmp.eq.s32.totalorder %s14, 3
      %p51 = por %p49, %p50
      %p52 = scmp.ne.s32.totalorder %s44, %s47
      %p53 = scmp.eq.s32.totalorder %s14, 0
      %p54 = por %p52, %p53
      %p55 = scmp.ne.s32.totalorder %s44, %s47
      %p56 = scmp.eq.s32.totalorder %s19, 3
      %p57 = por %p55, %p56
      %p58 = scmp.ne.s32.totalorder %s47, %s48
      %p59 = scmp.eq.s32.totalorder %s19, 0
      %p60 = por %p58, %p59
      %p61 = scmp.ne.s32.totalorder %s47, %s48
      %p62 = scmp.eq.s32.totalorder %s20, 3
      %p63 = por %p61, %p62
      %p65 = scmp.ne.s32.totalorder %s48, %s64
      %p66 = scmp.eq.s32.totalorder %s20, 0
      %p67 = por %p65, %p66
      %s68 = smul.u32 %s21, 2
      %s69 = sadd.s32 %s68, %s22
      %p70 = scmp.lt.s32.totalorder %s69, 2
      %s71 = scalar_select %p70, %s69, 2
      %s72 = smul.u32 %s33, 2
      %s73 = sadd.s32 %s72, %s29
      %p74 = scmp.lt.s32.totalorder %s73, 2
      %s75 = scalar_select %p74, %s73, 2
      %s76 = ssub.s32 %s71, %s75
      %p77 = scmp.eq.s32.totalorder %s76, 0
      %s79 = sadd.s32 %s78, 1
      %s80 = scalar_select %p77, %s78, %s79
      %p83 = pneg %p77
      %p84 = scmp.eq.s32.totalorder %s14, 3
      %p85 = por %p83, %p84
      %p86 = scmp.ne.s32.totalorder %s78, %s81
      %p87 = scmp.eq.s32.totalorder %s14, 0
      %p88 = por %p86, %p87
      %p89 = scmp.ne.s32.totalorder %s78, %s81
      %p90 = scmp.eq.s32.totalorder %s19, 3
      %p91 = por %p89, %p90
      %p92 = scmp.ne.s32.totalorder %s81, %s82
      %p93 = scmp.eq.s32.totalorder %s19, 0
      %p94 = por %p92, %p93
      %p95 = scmp.ne.s32.totalorder %s81, %s82
      %p96 = scmp.eq.s32.totalorder %s20, 3
      %p97 = por %p95, %p96
      %p99 = scmp.ne.s32.totalorder %s82, %s98
      %p100 = scmp.eq.s32.totalorder %s20, 0
      %p101 = por %p99, %p100
      %s102 = smul.u32 %s21, 2
      %s103 = sadd.s32 %s102, %s22
      %p104 = scmp.lt.s32.totalorder %s103, 2
      %s105 = scalar_select %p104, %s103, 2
      %s106 = smul.u32 %s33, 2
      %s107 = sadd.s32 %s106, %s29
      %p108 = scmp.lt.s32.totalorder %s107, 2
      %s109 = scalar_select %p108, %s107, 2
      %s110 = ssub.s32 %s105, %s109
      %p111 = scmp.eq.s32.totalorder %s110, 0
      %s113 = sadd.s32 %s112, 1
      %s114 = scalar_select %p111, %s112, %s113
      %p117 = pneg %p111
      %p118 = scmp.eq.s32.totalorder %s14, 3
      %p119 = por %p117, %p118
      %p120 = scmp.ne.s32.totalorder %s112, %s115
      %p121 = scmp.eq.s32.totalorder %s14, 0
      %p122 = por %p120, %p121
      %p123 = scmp.ne.s32.totalorder %s112, %s115
      %p124 = scmp.eq.s32.totalorder %s19, 3
      %p125 = por %p123, %p124
      %p126 = scmp.ne.s32.totalorder %s115, %s116
      %p127 = scmp.eq.s32.totalorder %s19, 0
      %p128 = por %p126, %p127
      %p129 = scmp.ne.s32.totalorder %s115, %s116
      %p130 = scmp.eq.s32.totalorder %s20, 3
      %p131 = por %p129, %p130
      %p133 = scmp.ne.s32.totalorder %s116, %s132
      %p134 = scmp.eq.s32.totalorder %s20, 0
      %p135 = por %p133, %p134
      %s136 = smul.u32 %s21, 2
      %s137 = sadd.s32 %s136, %s22
      %p138 = scmp.lt.s32.totalorder %s137, 2
      %s139 = scalar_select %p138, %s137, 2
      %s140 = smul.u32 %s33, 2
      %s141 = sadd.s32 %s140, %s29
      %p142 = scmp.lt.s32.totalorder %s141, 2
      %s143 = scalar_select %p142, %s141, 2
      %s144 = ssub.s32 %s139, %s143
      %p145 = scmp.eq.s32.totalorder %s144, 0
      %s147 = sadd.s32 %s146, 1
      %s148 = scalar_select %p145, %s146, %s147
      %p151 = pneg %p145
      %p152 = scmp.eq.s32.totalorder %s14, 3
      %p153 = por %p151, %p152
      %p154 = scmp.ne.s32.totalorder %s146, %s149
      %p155 = scmp.eq.s32.totalorder %s14, 0
      %p156 = por %p154, %p155
      %p157 = scmp.ne.s32.totalorder %s146, %s149
      %p158 = scmp.eq.s32.totalorder %s19, 3
      %p159 = por %p157, %p158
      %p160 = scmp.ne.s32.totalorder %s149, %s150
      %p161 = scmp.eq.s32.totalorder %s19, 0
      %p162 = por %p160, %p161
      %p163 = scmp.ne.s32.totalorder %s149, %s150
      %p164 = scmp.eq.s32.totalorder %s20, 3
      %p165 = por %p163, %p164
      %p167 = scmp.ne.s32.totalorder %s150, %s166
      %p168 = scmp.eq.s32.totalorder %s20, 0
      %p169 = por %p167, %p168
      %s170 = smul.u32 %s21, 2
      %s171 = sadd.s32 %s170, %s22
      %p172 = scmp.lt.s32.totalorder %s171, 2
      %s173 = scalar_select %p172, %s171, 2
      %s174 = smul.u32 %s33, 2
      %s175 = sadd.s32 %s174, %s29
      %p176 = scmp.lt.s32.totalorder %s175, 2
      %s177 = scalar_select %p176, %s175, 2
      %s178 = ssub.s32 %s173, %s177
      %p179 = scmp.eq.s32.totalorder %s178, 0
      %s181 = sadd.s32 %s180, 1
      %s182 = scalar_select %p179, %s180, %s181
      %p185 = pneg %p179
      %p186 = scmp.eq.s32.totalorder %s14, 3
      %p187 = por %p185, %p186
      %p188 = scmp.ne.s32.totalorder %s180, %s183
      %p189 = scmp.eq.s32.totalorder %s14, 0
      %p190 = por %p188, %p189
      %p191 = scmp.ne.s32.totalorder %s180, %s183
      %p192 = scmp.eq.s32.totalorder %s19, 3
      %p193 = por %p191, %p192
      %p194 = scmp.ne.s32.totalorder %s183, %s184
      %p195 = scmp.eq.s32.totalorder %s19, 0
      %p196 = por %p194, %p195
      %p197 = scmp.ne.s32.totalorder %s183, %s184
      %p198 = scmp.eq.s32.totalorder %s20, 3
      %p199 = por %p197, %p198
      %p201 = scmp.ne.s32.totalorder %s184, %s200
      %p202 = scmp.eq.s32.totalorder %s20, 0
      %p203 = por %p201, %p202
      %s204 = ssub.s32 %s21, %s33
      %p205 = scmp.eq.s32.totalorder %s204, 0
      %s207 = sadd.s32 %s206, 1
      %s208 = scalar_select %p205, %s206, %s207
      %p211 = pneg %p205
      %p212 = scmp.eq.s32.totalorder %s14, 3
      %p213 = por %p211, %p212
      %p214 = scmp.ne.s32.totalorder %s206, %s209
      %p215 = scmp.eq.s32.totalorder %s14, 0
      %p216 = por %p214, %p215
      %p217 = scmp.ne.s32.totalorder %s206, %s209
      %p218 = scmp.eq.s32.totalorder %s19, 3
      %p219 = por %p217, %p218
      %p220 = scmp.ne.s32.totalorder %s209, %s210
      %p221 = scmp.eq.s32.totalorder %s19, 0
      %p222 = por %p220, %p221
      %p223 = scmp.ne.s32.totalorder %s209, %s210
      %p224 = scmp.eq.s32.totalorder %s20, 3
      %p225 = por %p223, %p224
      %p227 = scmp.ne.s32.totalorder %s210, %s226
      %p228 = scmp.eq.s32.totalorder %s20, 0
      %p229 = por %p227, %p228
      %p230 = scmp.le.s32.totalorder 1, %s14
      %p231 = scmp.lt.s32.totalorder %s14, 5
      %p232 = pnand %p230, %p231
      %p233 = pneg %p232
      // Predicated region
      $region9: #{tpu_custom_call.1} parent=5 // pred_check
        _
      $region10: #{tpu_custom_call.1} parent=5 // pred_check_branch
        %235 = sbr.rel (%p232) target = $region12
      $region11: #{tpu_custom_call.1} parent=5 // pred_region
        %s236 = ssub.s32 %s14, 1
      $region12: #{tpu_custom_call.1} parent=5 // pred_fallthru
        _
      %p237 = scmp.lt.s32.totalorder %s14, 4
      // Predicated region
      $region13: #{tpu_custom_call.1} parent=5 // pred_check
        %p238 = pneg %p237
      $region14: #{tpu_custom_call.1} parent=5 // pred_check_branch
        %240 = sbr.rel (%p238) target = $region16
      $region15: #{tpu_custom_call.1} parent=5 // pred_region
        // Predicated region
        $region17: #{tpu_custom_call.1} parent=15 // pred_check
          %p241 = pneg %p54
        $region18: #{tpu_custom_call.1} parent=15 // pred_check_branch
          %243 = sbr.rel (%p241) target = $region20
        $region19: #{tpu_custom_call.1} parent=15 // pred_region
          %s244 = smul.u32 %s21, 2
          %s245 = sadd.s32 %s244, %s22
          %p246 = scmp.lt.s32.totalorder %s245, 2
          %s247 = scalar_select %p246, %s245, 2
          %s248 = smul.u32 16, %s247
          %s249 = ssub.s32 38, %s248
          %p250 = scmp.lt.s32.totalorder %s249, 16
          %s251 = scalar_select %p250, %s249, 16
          %s252 = smul.u32 8, %s251
          %p253 = scmp.lt.s32.totalorder %s248, 37
          %s254 = scalar_select %p253, %s248, 37
          %s255 = smul.addr %s254, 8
          %s256 = scalar_lea.vmem %s0, %s255
          %s257 = smul.u32 %s21, 2
          %s258 = sadd.s32 %s257, %s22
          %p259 = scmp.lt.s32.totalorder %s258, 2
          %s260 = scalar_select %p259, %s258, 2
          %s261 = smul.u32 16, %s260
          %s262 = ssub.s32 38, %s261
          %p263 = scmp.lt.s32.totalorder %s262, 16
          %s264 = scalar_select %p263, %s262, 16
          %s265 = smul.u32 8, %s264
        $region20: #{tpu_custom_call.1} parent=15 // pred_fallthru
          _
        // Predicated region
        $region21: #{tpu_custom_call.1} parent=15 // pred_check
          %p266 = pneg %p88
        $region22: #{tpu_custom_call.1} parent=15 // pred_check_branch
          %268 = sbr.rel (%p266) target = $region24
        $region23: #{tpu_custom_call.1} parent=15 // pred_region
          %s269 = smul.u32 %s21, 2
          %s270 = sadd.s32 %s269, %s22
          %p271 = scmp.lt.s32.totalorder %s270, 2
          %s272 = scalar_select %p271, %s270, 2
          %s273 = smul.u32 16, %s272
          %s274 = ssub.s32 38, %s273
          %p275 = scmp.lt.s32.totalorder %s274, 16
          %s276 = scalar_select %p275, %s274, 16
          %s277 = smul.u32 8, %s276
          %p278 = scmp.lt.s32.totalorder %s273, 37
          %s279 = scalar_select %p278, %s273, 37
          %s280 = smul.addr %s279, 8
          %s281 = scalar_lea.vmem %s1, %s280
          %s282 = smul.u32 %s21, 2
          %s283 = sadd.s32 %s282, %s22
          %p284 = scmp.lt.s32.totalorder %s283, 2
          %s285 = scalar_select %p284, %s283, 2
          %s286 = smul.u32 16, %s285
          %s287 = ssub.s32 38, %s286
          %p288 = scmp.lt.s32.totalorder %s287, 16
          %s289 = scalar_select %p288, %s287, 16
          %s290 = smul.u32 8, %s289
        $region24: #{tpu_custom_call.1} parent=15 // pred_fallthru
          _
        // Predicated region
        $region25: #{tpu_custom_call.1} parent=15 // pred_check
          %p291 = pneg %p122
        $region26: #{tpu_custom_call.1} parent=15 // pred_check_branch
          %293 = sbr.rel (%p291) target = $region28
        $region27: #{tpu_custom_call.1} parent=15 // pred_region
          %s294 = smul.u32 %s21, 2
          %s295 = sadd.s32 %s294, %s22
          %p296 = scmp.lt.s32.totalorder %s295, 2
          %s297 = scalar_select %p296, %s295, 2
          %s298 = smul.u32 16, %s297
          %s299 = ssub.s32 38, %s298
          %p300 = scmp.lt.s32.totalorder %s299, 16
          %s301 = scalar_select %p300, %s299, 16
          %s302 = smul.u32 8, %s301
          %p303 = scmp.lt.s32.totalorder %s298, 37
          %s304 = scalar_select %p303, %s298, 37
          %s305 = smul.addr %s304, 8
          %s306 = scalar_lea.vmem %s2, %s305
          %s307 = smul.u32 %s21, 2
          %s308 = sadd.s32 %s307, %s22
          %p309 = scmp.lt.s32.totalorder %s308, 2
          %s310 = scalar_select %p309, %s308, 2
          %s311 = smul.u32 16, %s310
          %s312 = ssub.s32 38, %s311
          %p313 = scmp.lt.s32.totalorder %s312, 16
          %s314 = scalar_select %p313, %s312, 16
          %s315 = smul.u32 8, %s314
        $region28: #{tpu_custom_call.1} parent=15 // pred_fallthru
          _
        // Predicated region
        $region29: #{tpu_custom_call.1} parent=15 // pred_check
          %p316 = pneg %p156
        $region30: #{tpu_custom_call.1} parent=15 // pred_check_branch
          %318 = sbr.rel (%p316) target = $region32
        $region31: #{tpu_custom_call.1} parent=15 // pred_region
          %s319 = smul.u32 %s21, 2
          %s320 = sadd.s32 %s319, %s22
          %p321 = scmp.lt.s32.totalorder %s320, 2
          %s322 = scalar_select %p321, %s320, 2
          %s323 = smul.u32 16, %s322
          %s324 = ssub.s32 38, %s323
          %p325 = scmp.lt.s32.totalorder %s324, 16
          %s326 = scalar_select %p325, %s324, 16
          %s327 = smul.u32 8, %s326
          %p328 = scmp.lt.s32.totalorder %s323, 37
          %s329 = scalar_select %p328, %s323, 37
          %s330 = smul.addr %s329, 8
          %s331 = scalar_lea.vmem %s3, %s330
          %s332 = smul.u32 %s21, 2
          %s333 = sadd.s32 %s332, %s22
          %p334 = scmp.lt.s32.totalorder %s333, 2
          %s335 = scalar_select %p334, %s333, 2
          %s336 = smul.u32 16, %s335
          %s337 = ssub.s32 38, %s336
          %p338 = scmp.lt.s32.totalorder %s337, 16
          %s339 = scalar_select %p338, %s337, 16
          %s340 = smul.u32 8, %s339
        $region32: #{tpu_custom_call.1} parent=15 // pred_fallthru
          _
        // Predicated region
        $region33: #{tpu_custom_call.1} parent=15 // pred_check
          %p341 = pneg %p190
        $region34: #{tpu_custom_call.1} parent=15 // pred_check_branch
          %343 = sbr.rel (%p341) target = $region36
        $region35: #{tpu_custom_call.1} parent=15 // pred_region
          %s344 = smul.u32 %s21, 2
          %s345 = sadd.s32 %s344, %s22
          %p346 = scmp.lt.s32.totalorder %s345, 2
          %s347 = scalar_select %p346, %s345, 2
          %p348 = scmp.lt.s32.totalorder %s347, 2
          %s349 = scalar_select %p348, %s347, 2
          %s350 = scalar_lea.vmem %s4, %s349
          %s351 = smul.u32 %s21, 2
          %s352 = sadd.s32 %s351, %s22
          %p353 = scmp.lt.s32.totalorder %s352, 2
          %s354 = scalar_select %p353, %s352, 2
        $region36: #{tpu_custom_call.1} parent=15 // pred_fallthru
          _
      $region16: #{tpu_custom_call.1} parent=5 // pred_fallthru
        _
      %p355 = scmp.le.s32.totalorder 1, %s14
      %p356 = scmp.lt.s32.totalorder %s14, 5
      %p357 = pnand %p355, %p356
      %p358 = pneg %p357
      // Predicated region
      $region37: #{tpu_custom_call.1} parent=5 // pred_check
        _
      $region38: #{tpu_custom_call.1} parent=5 // pred_check_branch
        %360 = sbr.rel (%p357) target = $region40
      $region39: #{tpu_custom_call.1} parent=5 // pred_region
        %s361 = ssub.s32 %s14, 1
        %s362 = smul.u32 %s23, 2
        %s363 = sadd.s32 %s362, %s24
        %p364 = scmp.lt.s32.totalorder %s363, 2
        %s365 = scalar_select %p364, %s363, 2
        %s366 = smul.u32 16, %s365
        %s367 = ssub.s32 38, %s366
        %p368 = scmp.lt.s32.totalorder %s367, 16
        %s369 = scalar_select %p368, %s367, 16
        %s370 = smul.u32 8, %s369
        %p371 = scmp.lt.s32.totalorder %s366, 37
        %s372 = scalar_select %p371, %s366, 37
        %s373 = smul.addr %s372, 8
        %s374 = scalar_lea.vmem %s0, %s373
        %p375 = pneg %p60
        %p376 = pneg %p57
        %s377 = smul.u32 %s23, 2
        %s378 = sadd.s32 %s377, %s24
        %p379 = scmp.lt.s32.totalorder %s378, 2
        %s380 = scalar_select %p379, %s378, 2
        %s381 = smul.u32 16, %s380
        %s382 = ssub.s32 38, %s381
        %p383 = scmp.lt.s32.totalorder %s382, 16
        %s384 = scalar_select %p383, %s382, 16
        %s385 = smul.u32 8, %s384
        %p386 = scmp.lt.s32.totalorder %s381, 37
        %s387 = scalar_select %p386, %s381, 37
        %s388 = smul.addr %s387, 8
        %s389 = scalar_lea.vmem %s1, %s388
        %p390 = pneg %p94
        %p391 = pneg %p91
        %s392 = smul.u32 %s23, 2
        %s393 = sadd.s32 %s392, %s24
        %p394 = scmp.lt.s32.totalorder %s393, 2
        %s395 = scalar_select %p394, %s393, 2
        %s396 = smul.u32 16, %s395
        %s397 = ssub.s32 38, %s396
        %p398 = scmp.lt.s32.totalorder %s397, 16
        %s399 = scalar_select %p398, %s397, 16
        %s400 = smul.u32 8, %s399
        %p401 = scmp.lt.s32.totalorder %s396, 37
        %s402 = scalar_select %p401, %s396, 37
        %s403 = smul.addr %s402, 8
        %s404 = scalar_lea.vmem %s2, %s403
        %p405 = pneg %p128
        %p406 = pneg %p125
        %s407 = smul.u32 %s23, 2
        %s408 = sadd.s32 %s407, %s24
        %p409 = scmp.lt.s32.totalorder %s408, 2
        %s410 = scalar_select %p409, %s408, 2
        %s411 = smul.u32 16, %s410
        %s412 = ssub.s32 38, %s411
        %p413 = scmp.lt.s32.totalorder %s412, 16
        %s414 = scalar_select %p413, %s412, 16
        %s415 = smul.u32 8, %s414
        %p416 = scmp.lt.s32.totalorder %s411, 37
        %s417 = scalar_select %p416, %s411, 37
        %s418 = smul.addr %s417, 8
        %s419 = scalar_lea.vmem %s3, %s418
        %p420 = pneg %p162
        %p421 = pneg %p159
        %s422 = smul.u32 %s23, 2
        %s423 = sadd.s32 %s422, %s24
        %p424 = scmp.lt.s32.totalorder %s423, 2
        %s425 = scalar_select %p424, %s423, 2
        %p426 = scmp.lt.s32.totalorder %s425, 2
        %s427 = scalar_select %p426, %s425, 2
        %s428 = scalar_lea.vmem %s4, %s427
        %p429 = pneg %p196
        %p430 = pneg %p193
        %p431 = pneg %p222
        %p432 = pneg %p219
        %s433 = sand.u32 %s209, 1
        %s434 = scalar_lea.sflag [#allocation3], %s433
        %s435 = sand.u32 %s209, 1
        %s436 = smul.addr %s435, 2
        %s437 = scalar_lea.vmem [#allocation2], %s436
        %s438 = smul.u32 %s23, 2
        %s439 = sadd.s32 %s438, %s24
        %p440 = scmp.lt.s32.totalorder %s439, 2
        %s441 = scalar_select %p440, %s439, 2
        %s442 = smul.u32 16, %s441
        %s443 = ssub.s32 38, %s442
        %p444 = scmp.lt.s32.totalorder %s443, 16
        %s445 = scalar_select %p444, %s443, 16
        %s446 = smul.u32 8, %s445
        %p447 = scmp.lt.s32.totalorder %s442, 37
        %s448 = scalar_select %p447, %s442, 37
        %s449 = smul.addr %s448, 8
        %s450 = scalar_lea.vmem %s0, %s449
        %s451 = smul.u32 %s23, 2
        %s452 = sadd.s32 %s451, %s24
        %p453 = scmp.lt.s32.totalorder %s452, 2
        %s454 = scalar_select %p453, %s452, 2
        %s455 = smul.u32 16, %s454
        %s456 = ssub.s32 38, %s455
        %p457 = scmp.lt.s32.totalorder %s456, 16
        %s458 = scalar_select %p457, %s456, 16
        %s459 = smul.u32 8, %s458
        %s460 = smul.u32 %s23, 2
        %s461 = sadd.s32 %s460, %s24
        %p462 = scmp.lt.s32.totalorder %s461, 2
        %s463 = scalar_select %p462, %s461, 2
        %s464 = smul.u32 16, %s463
        %s465 = ssub.s32 38, %s464
        %p466 = scmp.lt.s32.totalorder %s465, 16
        %s467 = scalar_select %p466, %s465, 16
        %s468 = smul.u32 8, %s467
        %p469 = scmp.lt.s32.totalorder %s464, 37
        %s470 = scalar_select %p469, %s464, 37
        %s471 = smul.addr %s470, 8
        %s472 = scalar_lea.vmem %s1, %s471
        %s473 = smul.u32 %s23, 2
        %s474 = sadd.s32 %s473, %s24
        %p475 = scmp.lt.s32.totalorder %s474, 2
        %s476 = scalar_select %p475, %s474, 2
        %s477 = smul.u32 16, %s476
        %s478 = ssub.s32 38, %s477
        %p479 = scmp.lt.s32.totalorder %s478, 16
        %s480 = scalar_select %p479, %s478, 16
        %s481 = smul.u32 8, %s480
        %s482 = smul.u32 %s23, 2
        %s483 = sadd.s32 %s482, %s24
        %p484 = scmp.lt.s32.totalorder %s483, 2
        %s485 = scalar_select %p484, %s483, 2
        %s486 = smul.u32 16, %s485
        %s487 = ssub.s32 38, %s486
        %p488 = scmp.lt.s32.totalorder %s487, 16
        %s489 = scalar_select %p488, %s487, 16
        %s490 = smul.u32 8, %s489
        %p491 = scmp.lt.s32.totalorder %s486, 37
        %s492 = scalar_select %p491, %s486, 37
        %s493 = smul.addr %s492, 8
        %s494 = scalar_lea.vmem %s2, %s493
        %s495 = smul.u32 %s23, 2
        %s496 = sadd.s32 %s495, %s24
        %p497 = scmp.lt.s32.totalorder %s496, 2
        %s498 = scalar_select %p497, %s496, 2
        %s499 = smul.u32 16, %s498
        %s500 = ssub.s32 38, %s499
        %p501 = scmp.lt.s32.totalorder %s500, 16
        %s502 = scalar_select %p501, %s500, 16
        %s503 = smul.u32 8, %s502
        %s504 = smul.u32 %s23, 2
        %s505 = sadd.s32 %s504, %s24
        %p506 = scmp.lt.s32.totalorder %s505, 2
        %s507 = scalar_select %p506, %s505, 2
        %s508 = smul.u32 16, %s507
        %s509 = ssub.s32 38, %s508
        %p510 = scmp.lt.s32.totalorder %s509, 16
        %s511 = scalar_select %p510, %s509, 16
        %s512 = smul.u32 8, %s511
        %p513 = scmp.lt.s32.totalorder %s508, 37
        %s514 = scalar_select %p513, %s508, 37
        %s515 = smul.addr %s514, 8
        %s516 = scalar_lea.vmem %s3, %s515
        %s517 = smul.u32 %s23, 2
        %s518 = sadd.s32 %s517, %s24
        %p519 = scmp.lt.s32.totalorder %s518, 2
        %s520 = scalar_select %p519, %s518, 2
        %s521 = smul.u32 16, %s520
        %s522 = ssub.s32 38, %s521
        %p523 = scmp.lt.s32.totalorder %s522, 16
        %s524 = scalar_select %p523, %s522, 16
        %s525 = smul.u32 8, %s524
        %s526 = smul.u32 %s23, 2
        %s527 = sadd.s32 %s526, %s24
        %p528 = scmp.lt.s32.totalorder %s527, 2
        %s529 = scalar_select %p528, %s527, 2
        %p530 = scmp.lt.s32.totalorder %s529, 2
        %s531 = scalar_select %p530, %s529, 2
        %s532 = scalar_lea.vmem %s4, %s531
        %s533 = smul.u32 %s23, 2
        %s534 = sadd.s32 %s533, %s24
        %p535 = scmp.lt.s32.totalorder %s534, 2
        %s536 = scalar_select %p535, %s534, 2
        %p537 = scmp.eq.s32.totalorder %s24, 0
        // Predicated region
        $region41: #{tpu_custom_call.1} parent=39 // pred_check
          %p538 = pneg %p537
        $region42: #{tpu_custom_call.1} parent=39 // pred_check_branch
          %540 = sbr.rel (%p538) target = $region44
        $region43: #{tpu_custom_call.1} parent=39 // pred_region
          %vm541 = vcmask 254976
          %542 = vst.msk [vmem:[%s437] sm:$0x3] %vm541, 0.0
        $region44: #{tpu_custom_call.1} parent=39 // pred_fallthru
          _
        %v543 = vld [vmem:[%s450] sm:$0xff]
        %v544 = vld [vmem:[%s450 + $0x8] sm:$0xff]
        %v545 = vld [vmem:[%s450 + $0x10] sm:$0xff]
        %v546 = vld [vmem:[%s450 + $0x18] sm:$0xff]
        %v547 = vld [vmem:[%s450 + $0x20] sm:$0xff]
        %v548 = vld [vmem:[%s450 + $0x28] sm:$0xff]
        %v549 = vld [vmem:[%s450 + $0x30] sm:$0xff]
        %v550 = vld [vmem:[%s450 + $0x38] sm:$0xff]
        %v551 = vld [vmem:[%s450 + $0x40] sm:$0xff]
        %v552 = vld [vmem:[%s450 + $0x48] sm:$0xff]
        %v553 = vld [vmem:[%s450 + $0x50] sm:$0xff]
        %v554 = vld [vmem:[%s450 + $0x58] sm:$0xff]
        %v555 = vld [vmem:[%s450 + $0x60] sm:$0xff]
        %v556 = vld [vmem:[%s450 + $0x68] sm:$0xff]
        %v557 = vld [vmem:[%s450 + $0x70] sm:$0xff]
        %v558 = vld [vmem:[%s450 + $0x78] sm:$0xff]
        %v559 = vld [vmem:[%s472] sm:$0xff]
        %v560 = vld [vmem:[%s472 + $0x8] sm:$0xff]
        %v561 = vld [vmem:[%s472 + $0x10] sm:$0xff]
        %v562 = vld [vmem:[%s472 + $0x18] sm:$0xff]
        %v563 = vld [vmem:[%s472 + $0x20] sm:$0xff]
        %v564 = vld [vmem:[%s472 + $0x28] sm:$0xff]
        %v565 = vld [vmem:[%s472 + $0x30] sm:$0xff]
        %v566 = vld [vmem:[%s472 + $0x38] sm:$0xff]
        %v567 = vld [vmem:[%s472 + $0x40] sm:$0xff]
        %v568 = vld [vmem:[%s472 + $0x48] sm:$0xff]
        %v569 = vld [vmem:[%s472 + $0x50] sm:$0xff]
        %v570 = vld [vmem:[%s472 + $0x58] sm:$0xff]
        %v571 = vld [vmem:[%s472 + $0x60] sm:$0xff]
        %v572 = vld [vmem:[%s472 + $0x68] sm:$0xff]
        %v573 = vld [vmem:[%s472 + $0x70] sm:$0xff]
        %v574 = vld [vmem:[%s472 + $0x78] sm:$0xff]
        %v575 = vmax.f32 %v543, %v559
        %v576 = vmax.f32 %v544, %v560
        %v577 = vmax.f32 %v545, %v561
        %v578 = vmax.f32 %v546, %v562
        %v579 = vmax.f32 %v547, %v563
        %v580 = vmax.f32 %v548, %v564
        %v581 = vmax.f32 %v549, %v565
        %v582 = vmax.f32 %v550, %v566
        %v583 = vmax.f32 %v551, %v567
        %v584 = vmax.f32 %v552, %v568
        %v585 = vmax.f32 %v553, %v569
        %v586 = vmax.f32 %v554, %v570
        %v587 = vmax.f32 %v555, %v571
        %v588 = vmax.f32 %v556, %v572
        %v589 = vmax.f32 %v557, %v573
        %v590 = vmax.f32 %v558, %v574
        %v591 = vld [vmem:[%s494] sm:$0xff]
        %v592 = vld [vmem:[%s494 + $0x8] sm:$0xff]
        %v593 = vld [vmem:[%s494 + $0x10] sm:$0xff]
        %v594 = vld [vmem:[%s494 + $0x18] sm:$0xff]
        %v595 = vld [vmem:[%s494 + $0x20] sm:$0xff]
        %v596 = vld [vmem:[%s494 + $0x28] sm:$0xff]
        %v597 = vld [vmem:[%s494 + $0x30] sm:$0xff]
        %v598 = vld [vmem:[%s494 + $0x38] sm:$0xff]
        %v599 = vld [vmem:[%s494 + $0x40] sm:$0xff]
        %v600 = vld [vmem:[%s494 + $0x48] sm:$0xff]
        %v601 = vld [vmem:[%s494 + $0x50] sm:$0xff]
        %v602 = vld [vmem:[%s494 + $0x58] sm:$0xff]
        %v603 = vld [vmem:[%s494 + $0x60] sm:$0xff]
        %v604 = vld [vmem:[%s494 + $0x68] sm:$0xff]
        %v605 = vld [vmem:[%s494 + $0x70] sm:$0xff]
        %v606 = vld [vmem:[%s494 + $0x78] sm:$0xff]
        %v607 = vmax.f32 %v575, %v591
        %v608 = vmax.f32 %v576, %v592
        %v609 = vmax.f32 %v577, %v593
        %v610 = vmax.f32 %v578, %v594
        %v611 = vmax.f32 %v579, %v595
        %v612 = vmax.f32 %v580, %v596
        %v613 = vmax.f32 %v581, %v597
        %v614 = vmax.f32 %v582, %v598
        %v615 = vmax.f32 %v583, %v599
        %v616 = vmax.f32 %v584, %v600
        %v617 = vmax.f32 %v585, %v601
        %v618 = vmax.f32 %v586, %v602
        %v619 = vmax.f32 %v587, %v603
        %v620 = vmax.f32 %v588, %v604
        %v621 = vmax.f32 %v589, %v605
        %v622 = vmax.f32 %v590, %v606
        %v623 = vld [vmem:[%s516] sm:$0xff]
        %v624 = vld [vmem:[%s516 + $0x8] sm:$0xff]
        %v625 = vld [vmem:[%s516 + $0x10] sm:$0xff]
        %v626 = vld [vmem:[%s516 + $0x18] sm:$0xff]
        %v627 = vld [vmem:[%s516 + $0x20] sm:$0xff]
        %v628 = vld [vmem:[%s516 + $0x28] sm:$0xff]
        %v629 = vld [vmem:[%s516 + $0x30] sm:$0xff]
        %v630 = vld [vmem:[%s516 + $0x38] sm:$0xff]
        %v631 = vld [vmem:[%s516 + $0x40] sm:$0xff]
        %v632 = vld [vmem:[%s516 + $0x48] sm:$0xff]
        %v633 = vld [vmem:[%s516 + $0x50] sm:$0xff]
        %v634 = vld [vmem:[%s516 + $0x58] sm:$0xff]
        %v635 = vld [vmem:[%s516 + $0x60] sm:$0xff]
        %v636 = vld [vmem:[%s516 + $0x68] sm:$0xff]
        %v637 = vld [vmem:[%s516 + $0x70] sm:$0xff]
        %v638 = vld [vmem:[%s516 + $0x78] sm:$0xff]
        %v639 = vmax.f32 %v607, %v623
        %v640 = vmax.f32 %v608, %v624
        %v641 = vmax.f32 %v609, %v625
        %v642 = vmax.f32 %v610, %v626
        %v643 = vmax.f32 %v611, %v627
        %v644 = vmax.f32 %v612, %v628
        %v645 = vmax.f32 %v613, %v629
        %v646 = vmax.f32 %v614, %v630
        %v647 = vmax.f32 %v615, %v631
        %v648 = vmax.f32 %v616, %v632
        %v649 = vmax.f32 %v617, %v633
        %v650 = vmax.f32 %v618, %v634
        %v651 = vmax.f32 %v619, %v635
        %v652 = vmax.f32 %v620, %v636
        %v653 = vmax.f32 %v621, %v637
        %v654 = vmax.f32 %v622, %v638
        %v655 = vld [vmem:[%s532] sm:$0x1]
        %v656 = vlaneseq
        %v657 = vshrl.u32 %v656, 7
        %v658 = vperm.slane %v655, 0
        %vm659 = vcmp.eq.s32.totalorder %v657, %v658
        %s660 = smul.u32 %s23, 2
        %s661 = sadd.s32 %s660, %s24
        %s662 = smul.u32 %s661, 128
        %v663 = vlaneseq
        %v664 = vand.u32 %v663, 127
        %v665 = vstv %s662
        %v666 = vadd.s32 %v664, %v665
        %vm667 = vcmp.lt.s32.totalorder %v666, 300
        %v668 = vsel %vm667, 1, 0
        %vm669 = vcmp.eq.s32.totalorder %v668, 1
        %vm670 = vmand %vm659, %vm669
        %v671 = vadd.s32 %v657, 8
        %v672 = vadd.s32 %v657, 16
        %v673 = vadd.s32 %v657, 24
        %v674 = vadd.s32 %v657, 32
        %v675 = vadd.s32 %v657, 40
        %v676 = vadd.s32 %v657, 48
        %v677 = vadd.s32 %v657, 56
        %v678 = vadd.s32 %v657, 64
        %v679 = vadd.s32 %v657, 72
        %v680 = vadd.s32 %v657, 80
        %v681 = vadd.s32 %v657, 88
        %v682 = vadd.s32 %v657, 96
        %v683 = vadd.s32 %v657, 104
        %v684 = vadd.s32 %v657, 112
        %v685 = vadd.s32 %v657, 120
        %v686 = vadd.s32 %v657, %v665
        %v687 = vadd.s32 %v671, %v665
        %v688 = vadd.s32 %v672, %v665
        %v689 = vadd.s32 %v673, %v665
        %v690 = vadd.s32 %v674, %v665
        %v691 = vadd.s32 %v675, %v665
        %v692 = vadd.s32 %v676, %v665
        %v693 = vadd.s32 %v677, %v665
        %v694 = vadd.s32 %v678, %v665
        %v695 = vadd.s32 %v679, %v665
        %v696 = vadd.s32 %v680, %v665
        %v697 = vadd.s32 %v681, %v665
        %v698 = vadd.s32 %v682, %v665
        %v699 = vadd.s32 %v683, %v665
        %v700 = vadd.s32 %v684, %v665
        %v701 = vadd.s32 %v685, %v665
        %vm702 = vcmp.lt.s32.totalorder %v686, 300
        %vm703 = vcmp.lt.s32.totalorder %v687, 300
        %vm704 = vcmp.lt.s32.totalorder %v688, 300
        %vm705 = vcmp.lt.s32.totalorder %v689, 300
        %vm706 = vcmp.lt.s32.totalorder %v690, 300
        %vm707 = vcmp.lt.s32.totalorder %v691, 300
        %vm708 = vcmp.lt.s32.totalorder %v692, 300
        %vm709 = vcmp.lt.s32.totalorder %v693, 300
        %vm710 = vcmp.lt.s32.totalorder %v694, 300
        %vm711 = vcmp.lt.s32.totalorder %v695, 300
        %vm712 = vcmp.lt.s32.totalorder %v696, 300
        %vm713 = vcmp.lt.s32.totalorder %v697, 300
        %vm714 = vcmp.lt.s32.totalorder %v698, 300
        %vm715 = vcmp.lt.s32.totalorder %v699, 300
        %vm716 = vcmp.lt.s32.totalorder %v700, 300
        %vm717 = vcmp.lt.s32.totalorder %v701, 300
        %v718 = vsel %vm702, 1, 0
        %v719 = vsel %vm703, 1, 0
        %v720 = vsel %vm704, 1, 0
        %v721 = vsel %vm705, 1, 0
        %v722 = vsel %vm706, 1, 0
        %v723 = vsel %vm707, 1, 0
        %v724 = vsel %vm708, 1, 0
        %v725 = vsel %vm709, 1, 0
        %v726 = vsel %vm710, 1, 0
        %v727 = vsel %vm711, 1, 0
        %v728 = vsel %vm712, 1, 0
        %v729 = vsel %vm713, 1, 0
        %v730 = vsel %vm714, 1, 0
        %v731 = vsel %vm715, 1, 0
        %v732 = vsel %vm716, 1, 0
        %v733 = vsel %vm717, 1, 0
        %vm734 = vcmp.eq.s32.totalorder %v718, 1
        %vm735 = vcmp.eq.s32.totalorder %v719, 1
        %vm736 = vcmp.eq.s32.totalorder %v720, 1
        %vm737 = vcmp.eq.s32.totalorder %v721, 1
        %vm738 = vcmp.eq.s32.totalorder %v722, 1
        %vm739 = vcmp.eq.s32.totalorder %v723, 1
        %vm740 = vcmp.eq.s32.totalorder %v724, 1
        %vm741 = vcmp.eq.s32.totalorder %v725, 1
        %vm742 = vcmp.eq.s32.totalorder %v726, 1
        %vm743 = vcmp.eq.s32.totalorder %v727, 1
        %vm744 = vcmp.eq.s32.totalorder %v728, 1
        %vm745 = vcmp.eq.s32.totalorder %v729, 1
        %vm746 = vcmp.eq.s32.totalorder %v730, 1
        %vm747 = vcmp.eq.s32.totalorder %v731, 1
        %vm748 = vcmp.eq.s32.totalorder %v732, 1
        %vm749 = vcmp.eq.s32.totalorder %v733, 1
        %v750 = vsel %vm734, %v639, 0.0
        %v751 = vsel %vm735, %v640, 0.0
        %v752 = vsel %vm736, %v641, 0.0
        %v753 = vsel %vm737, %v642, 0.0
        %v754 = vsel %vm738, %v643, 0.0
        %v755 = vsel %vm739, %v644, 0.0
        %v756 = vsel %vm740, %v645, 0.0
        %v757 = vsel %vm741, %v646, 0.0
        %v758 = vsel %vm742, %v647, 0.0
        %v759 = vsel %vm743, %v648, 0.0
        %v760 = vsel %vm744, %v649, 0.0
        %v761 = vsel %vm745, %v650, 0.0
        %v762 = vsel %vm746, %v651, 0.0
        %v763 = vsel %vm747, %v652, 0.0
        %v764 = vsel %vm748, %v653, 0.0
        %v765 = vsel %vm749, %v654, 0.0
        %v766 = vsel %vm670, 1, 0
        %v767 = vcvt.s32.f32 %v766
        %v768 = vld [vmem:[%s437] sm:$0x3]
        %769 = vmatpush.msra.mxu0 %v765
        %770 = vmatpush.msra.mxu0 %v764
        %771 = vmatpush.msra.mxu0 %v763
        %772 = vmatpush.msra.mxu0 %v762
        %773 = vmatpush.msra.mxu0 %v761
        %774 = vmatpush.msra.mxu0 %v760
        %775 = vmatpush.msra.mxu0 %v759
        %776 = vmatpush.msra.mxu0 %v758
        %777 = vmatpush.msra.mxu0 %v757
        %778 = vmatpush.msra.mxu0 %v756
        %779 = vmatpush.msra.mxu0 %v755
        %780 = vmatpush.msra.mxu0 %v754
        %781 = vmatpush.msra.mxu0 %v753
        %782 = vmatpush.msra.mxu0 %v752
        %783 = vmatpush.msra.mxu0 %v751
        %784 = vmatpush.msra.mxu0 %v750
        %785 = vmatmul.f32.gmra.mxu0 %v767
        %v786 = vpop.f32.mrf.mxu0
        %v787 = vadd.f32 0.0, %v786
        %788 = vdwg.mxu0
        %v789 = vadd.f32 %v768, %v787
        %vm790 = vcmask 254976
        %791 = vst.msk [vmem:[%s437] sm:$0x3] %vm790, %v789
        %s792 = sand.u32 %s209, 1
        %s793 = scalar_lea.sflag [#allocation3], %s792
        %s794 = sand.u32 %s209, 1
        %s795 = smul.addr %s794, 2
        %s796 = scalar_lea.vmem [#allocation2], %s795
        // Predicated region
        $region45: #{tpu_custom_call.1} parent=39 // pred_check
          %p797 = pneg %p219
        $region46: #{tpu_custom_call.1} parent=39 // pred_check_branch
          %799 = sbr.rel (%p797) target = $region48
        $region47: #{tpu_custom_call.1} parent=39 // pred_region
          %801 = vsyncadd %s793, 0
          %s802 = smul.addr %s23, 2
          %s803 = scalar_lea.hbm %s5, %s802
          %s805 = sshll.u32 %s796, 4
          %s806 = int_to_ptr.vmem [resolvable:$true] %s805
          %s807 = sshll.u32 %s803, 4
          %s808 = int_to_ptr.hbm [resolvable:$true] %s807
          %810 = dma.vmem_to_hbm [thread:$0]  %s806, 32, %s808, %s793
        $region48: #{tpu_custom_call.1} parent=39 // pred_fallthru
          _
      $region40: #{tpu_custom_call.1} parent=5 // pred_fallthru
        _
      %p811 = scmp.le.s32.totalorder 2, %s14
      // Predicated region
      $region49: #{tpu_custom_call.1} parent=5 // pred_check
        %p812 = pneg %p811
      $region50: #{tpu_custom_call.1} parent=5 // pred_check_branch
        %814 = sbr.rel (%p812) target = $region52
      $region51: #{tpu_custom_call.1} parent=5 // pred_region
        %s815 = ssub.s32 %s14, 2
        // Predicated region
        $region53: #{tpu_custom_call.1} parent=51 // pred_check
          %p816 = pneg %p225
        $region54: #{tpu_custom_call.1} parent=51 // pred_check_branch
          %818 = sbr.rel (%p816) target = $region56
        $region55: #{tpu_custom_call.1} parent=51 // pred_region
          %s819 = sand.u32 %s210, 1
          %s820 = scalar_lea.sflag [#allocation3], %s819
          %s821 = sand.u32 %s210, 1
          %s822 = smul.addr %s821, 2
          %s823 = scalar_lea.vmem [#allocation2], %s822
          %825 = dma.done %s820, 32
        $region56: #{tpu_custom_call.1} parent=51 // pred_fallthru
          _
      $region52: #{tpu_custom_call.1} parent=5 // pred_fallthru
        _
    $region6: #{tpu_custom_call.1} parent=1 // loop_footer
      %s18 = sadd.s32 1, %s14
    $region7: #{tpu_custom_call.1} parent=1 // loop_footer_branch
      %13 = sbr.rel target = $region3
    $region8: #{tpu_custom_call.1} parent=1 // loop_exit
      _
    %826 = vsyncpa [#allocation3], 1
    %s827 = scalar_lea.sflag [#allocation3], 1
    %828 = vsyncpa %s827, 1

</llo_original>
